<compile_context>
chip_gen: v7x
topology: tpu7x:2x2x1
jax: 0.10.0
libtpu: 0.0.40
codegen_flags: <defaults>
</compile_context>

<pallas_src>
import functools

import jax
import jax.numpy as jnp
from jax import lax
from jax.experimental import pallas as pl
from jax.experimental.pallas import tpu as pltpu


_NEG_BIG = -1e30                       # "minus infinity" that exp()s cleanly to 0
_MIN_TILE_BYTES = 2 * 1024 * 1024      # >=2 MiB of logits per tile amortizes step overhead
_MAX_TILE_BYTES = 8 * 1024 * 1024      # cap tile footprint (bigger buys ~1%, raises spill risk)


def _round_up(x, m):
    return ((x + m - 1) // m) * m


def _cdiv(a, b):
    return (a + b - 1) // b


# ----------------------------------------------------------------------------
# Kernels
# ----------------------------------------------------------------------------
def _full_c_kernel(x_ref, w_ref, t_ref, o_ref, *, c_total):
    """Single-pass tile with the full class extent resident in VMEM.

    x_ref: (bn, C) logits tile (f32 or bf16; math is f32 in-register)
    w_ref: (1, C)  f32 class-prior adjustment row (resident across the grid)
    t_ref: (bn, 1) int32 targets
    o_ref: (1, bn) f32 loss row (lane-dense, unmasked stores)
    """
    x = x_ref[...].astype(jnp.float32) + w_ref[...]              # logit adjustment
    # (1, C) iota row; broadcasting against t builds the compares without
    # materializing a full (bn, C) int32 tile.
    col = lax.broadcasted_iota(jnp.int32, (1, c_total), 1)
    if c_total % 128 != 0:
        # C not lane-aligned: explicitly neutralize the tile's lane padding so the
        # max / sum below can never see stale VMEM garbage.
        x = jnp.where(col < c_total, x, _NEG_BIG)
    m = jnp.max(x, axis=-1, keepdims=True)                       # (bn, 1)
    z = x - m                                                    # row max cancels in the loss
    t = t_ref[...]                                               # (bn, 1) int32
    sum_exp = jnp.sum(jnp.exp(z), axis=-1)                       # (bn,)
    tgt_z = jnp.sum(jnp.where(col == t, z, 0.0), axis=-1)        # gather from live z
    o_ref[...] = (jnp.log(sum_exp) - tgt_z).reshape(1, -1)


def _chunked_c_kernel(x_ref, w_ref, t_ref, o_ref, m_sc, l_sc, tgt_sc, *,
                      c_total, c_block):
    """Online-logsumexp over class chunks (large-vocab path).

    Grid = (row_tiles, class_chunks), class axis innermost / "arbitrary".
    Scratch (bn, 1) f32: running max, running sum(exp), running target logit.
    """
    ci = pl.program_id(1)

    @pl.when(ci == 0)
    def _init():
        m_sc[...] = jnp.full_like(m_sc, _NEG_BIG)
        l_sc[...] = jnp.zeros_like(l_sc)
        tgt_sc[...] = jnp.zeros_like(tgt_sc)

    x = x_ref[...].astype(jnp.float32) + w_ref[...]                    # (bn, cb)
    col = lax.broadcasted_iota(jnp.int32, (1, c_block), 1) + ci * c_block
    x = jnp.where(col < c_total, x, _NEG_BIG)                          # mask partial last chunk
    t = t_ref[...]                                                     # (bn, 1)

    m_prev = m_sc[...]
    m_new = jnp.maximum(m_prev, jnp.max(x, axis=-1, keepdims=True))
    alpha = jnp.exp(m_prev - m_new)
    l_sc[...] = alpha * l_sc[...] + jnp.sum(jnp.exp(x - m_new), axis=-1, keepdims=True)
    tgt_sc[...] = tgt_sc[...] + jnp.sum(jnp.where(col == t, x, 0.0),
                                        axis=-1, keepdims=True)
    m_sc[...] = m_new

    @pl.when(ci == pl.num_programs(1) - 1)
    def _finalize():
        # Squeeze (bn, 1) -> (bn,) via a size-1 reduction (known-good layout path),
        # then emit the lane-dense (1, bn) loss row.
        m1 = jnp.sum(m_sc[...], axis=-1)
        l1 = jnp.sum(l_sc[...], axis=-1)
        t1 = jnp.sum(tgt_sc[...], axis=-1)
        o_ref[...] = (m1 + jnp.log(l1) - t1).reshape(1, -1)


# ----------------------------------------------------------------------------
# Tiling plan
# ----------------------------------------------------------------------------
def _plan(n, c, x_dtype, block_rows=None, block_cols=None):
    """Choose (mode, block_n, c_block, vmem_limit).  No padding of the logits:
    row tiles may be partial; the class dim is full-extent ("full") or chunked
    with an online logsumexp ("chunk") for very large vocabularies."""
    itemsize = jnp.dtype(x_dtype).itemsize
    row_bytes = max(c * itemsize, 1)
    n8 = _round_up(max(n, 1), 8)

    try:
        cap = int(pltpu.get_tpu_info().vmem_capacity_bytes)
    except Exception:
        cap = 64 * 1024 * 1024
    # ~64 MiB on v5e/v6e (128 MiB VMEM), ~32 MiB on v7x (64 MiB VMEM): enough for
    # double-buffered 8 MiB tiles while leaving headroom for the rest of the program.
    vmem_limit = int(min(cap // 2, 64 * 1024 * 1024))
    budget = (vmem_limit * 3) // 4

    # Per-row footprint in "full" mode: double-buffered input tile + ~3 f32
    # tile-sized intermediates (adjusted logits / exp / target select).
    per_row_full = 2 * row_bytes + 3 * 4 * c
    rows_vmem = budget // max(per_row_full, 1)
    rows_8mb = _MAX_TILE_BYTES // row_bytes
    upper = min(rows_vmem, rows_8mb)

    if block_cols is not None:
        mode = "chunk"
    else:
        mode = "full" if upper >= min(128, n8) else "chunk"

    if mode == "full":
        # Tile-byte floor (>=2 MiB of logits / >=128 rows) amortizes the ~0.35 us
        # per-grid-step overhead; only cap further to get >= ~4 steps.
        floor = min(max(128, _cdiv(_MIN_TILE_BYTES, row_bytes)), upper)
        block_n = max(8, min(upper, max(floor, _cdiv(n, 4))))
        if block_rows is not None:
            block_n = max(8, int(block_rows))
        if block_n >= n8:
            if n8 >= 256:
                # Split a single-tile batch into >=2 lane-dense tiles so both v7x
                # TensorCores get work on the "parallel" row axis.
                block_n = _round_up(_cdiv(n8, 2), 128)
            else:
                block_n = n8
        if block_n < n8:
            block_n = max(128, (block_n // 128) * 128)   # lane-dense output tiles
        return ("full", int(block_n), int(c), vmem_limit)

    # "chunk": large-vocab online logsumexp (keeps lane-dense stores and roofline
    # row tiles instead of the old sub-128-row masked-column fallback).
    if block_rows is not None:
        block_n = max(8, int(block_rows))
    else:
        block_n = n8 if n8 <= 256 else 256
    if block_n < n8:
        block_n = max(128, (block_n // 128) * 128)
    else:
        block_n = n8
    per_col = block_n * (2 * itemsize + 3 * 4)
    c_block = min(budget // max(per_col, 1),
                  (_MAX_TILE_BYTES // 2) // max(block_n * itemsize, 1))
    c_block = max(128, (c_block // 128) * 128)
    c_block = min(c_block, _round_up(c, 128))
    if block_cols is not None:
        c_block = int(block_cols)                        # must be a multiple of 128
    return ("chunk", int(block_n), int(c_block), vmem_limit)


# ----------------------------------------------------------------------------
# pallas_call wrapper
# ----------------------------------------------------------------------------
@functools.partial(jax.jit, static_argnames=("plan",))
def _loss_call(x, target, w, *, plan):
    mode, block_n, c_block, vmem_limit = plan
    n, c = x.shape
    t2d = target.astype(jnp.int32).reshape(n, 1)
    w = w.reshape(1, c).astype(jnp.float32)

    grid_rows = _cdiv(n, block_n)
    n_out = grid_rows * block_n               # tiny over-allocation of the output only
    out_shape = jax.ShapeDtypeStruct((1, n_out), jnp.float32)

    if mode == "full":
        grid = (grid_rows,)
        in_specs = [
            pl.BlockSpec((block_n, c), lambda i: (i, 0)),     # logits tile (full C)
            pl.BlockSpec((1, c), lambda i: (0, 0)),           # class-prior row (resident)
            pl.BlockSpec((block_n, 1), lambda i: (i, 0)),     # targets tile
        ]
        out_specs = pl.BlockSpec((1, block_n), lambda i: (0, i))
        scratch_shapes = ()
        dims = ("parallel",)
        kernel = functools.partial(_full_c_kernel, c_total=c)
    else:
        grid = (grid_rows, _cdiv(c, c_block))
        in_specs = [
            pl.BlockSpec((block_n, c_block), lambda i, k: (i, k)),
            pl.BlockSpec((1, c_block), lambda i, k: (0, k)),
            pl.BlockSpec((block_n, 1), lambda i, k: (i, 0)),
        ]
        out_specs = pl.BlockSpec((1, block_n), lambda i, k: (0, i))
        scratch_shapes = [pltpu.VMEM((block_n, 1), jnp.float32)] * 3
        dims = ("parallel", "arbitrary")
        kernel = functools.partial(_chunked_c_kernel, c_total=c, c_block=c_block)

    out = pl.pallas_call(
        kernel,
        out_shape=out_shape,
        grid_spec=pltpu.PrefetchScalarGridSpec(
            num_scalar_prefetch=0,
            grid=grid,
            in_specs=in_specs,
            out_specs=out_specs,
            scratch_shapes=scratch_shapes,
        ),
        compiler_params=pltpu.CompilerParams(
            dimension_semantics=dims,
            vmem_limit_bytes=vmem_limit,
        ),
    )(x, w, t2d)
    return out[0, :n]


def logit_adjustment_loss(x, target, scaled_class_weights, *,
                          block_rows=None, block_cols=None):
    """Logit-adjusted cross entropy, reduction='none'.

    x: (N, C) float logits (f32 or bf16 — bf16 halves HBM traffic, math is f32
       in-register).  target: (N,) int class ids in [0, C).
    scaled_class_weights: (1, C) or (C,) f32 log-prior row.
    Returns (N,) f32 per-sample loss (matches F.cross_entropy reduction='none').
    Note: targets are assumed in-range; no ignore_index handling (the reference
    module does not use one).
    """
    n, c = x.shape
    plan = _plan(n, c, x.dtype, block_rows, block_cols)
    return _loss_call(x, target, scaled_class_weights, plan=plan)


def make_scaled_class_weights(cls_num_list, tau=1.0):
    counts = jnp.asarray(cls_num_list, dtype=jnp.float32)
    base_probs = counts / jnp.sum(counts)
    w = tau * jnp.log(base_probs + 1e-12)
    return w.reshape(1, -1).astype(jnp.float32)


# ----------------------------------------------------------------------------
# Self-test
# ----------------------------------------------------------------------------
if __name__ == "__main__":
    key = jax.random.PRNGKey(0)
    k1, k2, k3, k4, k5, k6 = jax.random.split(key, 6)

    def ref_loss(x, t, w):
        adj = x.astype(jnp.float32) + w.reshape(1, -1)
        return jax.nn.logsumexp(adj, axis=-1) - adj[jnp.arange(x.shape[0]), t]

    # 1) tiny shapes consistent with the module (batch=8, classes=32), grid=1.
    N, C = 8, 32
    w = make_scaled_class_weights([int(100 * 0.9 ** i) + 1 for i in range(C)], tau=1.0)
    x = jax.random.normal(k1, (N, C), dtype=jnp.float32)
    t = jax.random.randint(k2, (N,), 0, C, dtype=jnp.int32)
    out = jax.block_until_ready(logit_adjustment_loss(x, t, w))
    assert out.shape == (N,)
    assert jnp.allclose(out, ref_loss(x, t, w), atol=1e-5, rtol=1e-5)

    # 2) unaligned C (1000), multi-tile lane-dense path with a partial tail row tile.
    N2, C2 = 300, 1000
    w2 = make_scaled_class_weights([int(1000 * 0.99 ** i) + 1 for i in range(C2)], tau=1.0)
    x2 = jax.random.normal(k3, (N2, C2), dtype=jnp.float32)
    t2 = jax.random.randint(k4, (N2,), 0, C2, dtype=jnp.int32)
    out2 = jax.block_until_ready(logit_adjustment_loss(x2, t2, w2))
    ref2 = ref_loss(x2, t2, w2)
    assert out2.shape == (N2,)
    assert jnp.allclose(out2, ref2, atol=2e-4, rtol=1e-5), float(jnp.max(jnp.abs(out2 - ref2)))

    # 3) forced class-chunked online-logsumexp path (large-vocab code path),
    #    3 chunks with a partial/masked last chunk.
    out3 = jax.block_until_ready(
        logit_adjustment_loss(x2, t2, w2, block_rows=128, block_cols=384))
    assert jnp.allclose(out3, ref2, atol=2e-4, rtol=1e-5), float(jnp.max(jnp.abs(out3 - ref2)))

    # 4) bf16 logits accepted directly (no wrapper pre-cast; f32 math in-register).
    N4, C4 = 64, 256
    w4 = make_scaled_class_weights([i + 1 for i in range(C4)], tau=1.0)
    x4 = jax.random.normal(k5, (N4, C4), dtype=jnp.float32).astype(jnp.bfloat16)
    t4 = jax.random.randint(k6, (N4,), 0, C4, dtype=jnp.int32)
    out4 = jax.block_until_ready(logit_adjustment_loss(x4, t4, w4))
    ref4 = ref_loss(x4, t4, w4)
    assert jnp.allclose(out4, ref4, atol=1e-4, rtol=1e-4), float(jnp.max(jnp.abs(out4 - ref4)))

    print("KERNEL_OK")
</pallas_src>

<mosaic_0001>
module attributes {stable_mosaic.version = 11 : i64} {
  func.func @_full_c_kernel(%arg0: i32, %arg1: memref<8x32xf32, #tpu.memory_space<vmem>>, %arg2: memref<1x32xf32, #tpu.memory_space<vmem>>, %arg3: memref<8x1xi32, #tpu.memory_space<vmem>>, %arg4: memref<1x8xf32, #tpu.memory_space<vmem>>) attributes {dimension_semantics = [#tpu.dimension_semantics<parallel>], iteration_bounds = array<i64: 1>, scalar_prefetch = 0 : i64, scratch_operands = 0 : i64, tpu.core_type = #tpu.core_type<tc>, window_params = [{transform_indices = @transform_0, window_bounds = array<i64: 8, 32>}, {pipeline_mode = #tpu.pipeline_mode<synchronous>, transform_indices = @transform_1, window_bounds = array<i64: 1, 32>}, {transform_indices = @transform_2, window_bounds = array<i64: 8, 1>}, {transform_indices = @transform_3, window_bounds = array<i64: 1, 8>}]} {
    %c0 = arith.constant 0 : index
    %c0_0 = arith.constant 0 : index
    %0 = vector.load %arg1[%c0, %c0_0] : memref<8x32xf32, #tpu.memory_space<vmem>>, vector<8x32xf32>
    %c0_1 = arith.constant 0 : index
    %c0_2 = arith.constant 0 : index
    %1 = vector.load %arg2[%c0_1, %c0_2] : memref<1x32xf32, #tpu.memory_space<vmem>>, vector<1x32xf32>
    %2 = vector.broadcast %1 : vector<1x32xf32> to vector<8x32xf32>
    %3 = arith.addf %0, %2 : vector<8x32xf32>
    %4 = tpu.iota {dimensions = array<i32: 1>} : vector<1x32xi32>
    %c32_i32 = arith.constant 32 : i32
    %5 = vector.broadcast %c32_i32 : i32 to vector<1x32xi32>
    %6 = arith.cmpi slt, %4, %5 : vector<1x32xi32>
    %cst = arith.constant -1.000000e+30 : f32
    %7 = vector.shape_cast %6 : vector<1x32xi1> to vector<1x32xi1>
    %8 = vector.broadcast %7 : vector<1x32xi1> to vector<8x32xi1>
    %9 = vector.broadcast %cst : f32 to vector<8x32xf32>
    %10 = arith.select %8, %3, %9 : vector<8x32xi1>, vector<8x32xf32>
    %cst_3 = arith.constant dense<0xFF800000> : vector<8xf32>
    %11 = vector.multi_reduction <maximumf>, %10, %cst_3 [1] : vector<8x32xf32> to vector<8xf32>
    %12 = vector.shape_cast %11 : vector<8xf32> to vector<8x1xf32>
    %13 = vector.broadcast %12 : vector<8x1xf32> to vector<8x32xf32>
    %14 = arith.subf %10, %13 : vector<8x32xf32>
    %c0_4 = arith.constant 0 : index
    %c0_5 = arith.constant 0 : index
    %15 = vector.load %arg3[%c0_4, %c0_5] : memref<8x1xi32, #tpu.memory_space<vmem>>, vector<8x1xi32>
    %16 = math.exp %14 : vector<8x32xf32>
    %cst_6 = arith.constant dense<0.000000e+00> : vector<8xf32>
    %17 = vector.multi_reduction <add>, %16, %cst_6 [1] : vector<8x32xf32> to vector<8xf32>
    %18 = vector.broadcast %4 : vector<1x32xi32> to vector<8x32xi32>
    %19 = vector.broadcast %15 : vector<8x1xi32> to vector<8x32xi32>
    %20 = arith.cmpi eq, %18, %19 : vector<8x32xi32>
    %cst_7 = arith.constant 0.000000e+00 : f32
    %21 = vector.broadcast %cst_7 : f32 to vector<8x32xf32>
    %22 = arith.select %20, %14, %21 : vector<8x32xi1>, vector<8x32xf32>
    %cst_8 = arith.constant dense<0.000000e+00> : vector<8xf32>
    %23 = vector.multi_reduction <add>, %22, %cst_8 [1] : vector<8x32xf32> to vector<8xf32>
    %24 = math.log %17 : vector<8xf32>
    %25 = arith.subf %24, %23 : vector<8xf32>
    %26 = vector.shape_cast %25 : vector<8xf32> to vector<1x8xf32>
    %c0_9 = arith.constant 0 : index
    %c0_10 = arith.constant 0 : index
    %27 = vector.load %arg4[%c0_9, %c0_10] : memref<1x8xf32, #tpu.memory_space<vmem>>, vector<1x8xf32>
    tpu.vector_store %arg4[%c0_9, %c0_10], %26 {strides = array<i32>} : memref<1x8xf32, #tpu.memory_space<vmem>>, vector<1x8xf32>,
    return
  }
  func.func @transform_0(%arg0: i32) -> (i32, i32) {
    %c0_i32 = arith.constant 0 : i32
    %c0_i32_0 = arith.constant 0 : i32
    return %arg0, %c0_i32 : i32, i32
  }
  func.func @transform_1(%arg0: i32) -> (i32, i32) {
    %c0_i32 = arith.constant 0 : i32
    %c0_i32_0 = arith.constant 0 : i32
    %c0_i32_1 = arith.constant 0 : i32
    return %c0_i32, %c0_i32_0 : i32, i32
  }
  func.func @transform_2(%arg0: i32) -> (i32, i32) {
    %c0_i32 = arith.constant 0 : i32
    %c0_i32_0 = arith.constant 0 : i32
    return %arg0, %c0_i32 : i32, i32
  }
  func.func @transform_3(%arg0: i32) -> (i32, i32) {
    %c0_i32 = arith.constant 0 : i32
    %c0_i32_0 = arith.constant 0 : i32
    return %c0_i32, %arg0 : i32, i32
  }
}

</mosaic_0001>

<llo_original>
// kernel: _loss_call.1
$region0: #{_loss_call.1}
  #allocation0 [shape = 'u32[]', space=smem, size = 0x4, offset = 0x4, fixed_abs, tag = 'smem constant byte address 0x4 - core index']
  #allocation1 [shape = 'u32[144,128]{1,0:T(1,128)}', space=vmem, size = 0x12000, scoped, tag = 'internal scratch']
  %s0 = inlined_call_operand.vmem [shape: f32[8,32], index: 0, kind: input, shape index: {}]
  %s1 = inlined_call_operand.vmem [shape: f32[1,32], index: 1, kind: input, shape index: {}]
  %s2 = inlined_call_operand.vmem [shape: s32[8,1], index: 2, kind: input, shape index: {}]
  %s3 = inlined_call_operand.hbm [shape: f32[1,8], index: 3, kind: output, shape index: {}]
  %s4 = sld [smem:[#allocation0]]
  $region22: #{_loss_call.1} parent=0
    _
  %s6 = ssub.s32 1, %s4
  %s7 = scalar_select 0, %s6, %s4
  $region1: #{_loss_call.1} parent=0
    #allocation2 [shape = 'u8[512]{0}', space=vmem, size = 0x400, scoped, tag = 'output window, operand 0, single buffered']
    #allocation3 [shape = 's32[1]{0}', space=sflag, size = 0x4, scoped, tag = 'scoped memory for _loss_call.1']
    %8 = vsyncpa [#allocation3], 0
    // Predicated region
    $region2: #{_loss_call.1} parent=1 // pred_check
      _
    $region3: #{_loss_call.1} parent=1 // pred_check_branch
      %10 = sbr.rel (0) target = $region5
    $region4: #{_loss_call.1} parent=1 // pred_region
      _
    $region5: #{_loss_call.1} parent=1 // pred_fallthru
      _
    // Predicated region
    $region6: #{_loss_call.1} parent=1 // pred_check
      _
    $region7: #{_loss_call.1} parent=1 // pred_check_branch
      %12 = sbr.rel (0) target = $region9
    $region8: #{_loss_call.1} parent=1 // pred_region
      _
    $region9: #{_loss_call.1} parent=1 // pred_fallthru
      _
    // Predicated region
    $region10: #{_loss_call.1} parent=1 // pred_check
      _
    $region11: #{_loss_call.1} parent=1 // pred_check_branch
      %14 = sbr.rel (0) target = $region13
    $region12: #{_loss_call.1} parent=1 // pred_region
      _
    $region13: #{_loss_call.1} parent=1 // pred_fallthru
      _
    %v15 = vld [vmem:[%s0] sm:$0xff]
    %v16 = vld [vmem:[%s1] sm:$0x1]
    %v18 = vlaneseq
    %v19 = vshrl.u32 %v18, 7
    %v20 = vsub.s32 0, %v19
    %v21 = vrot.slane %v16, %v20
    %v23 = vadd.f32 %v15, %v21
    %v24 = vlaneseq
    %v25 = vand.u32 %v24, 127
    %vm26 = vcmp.lt.s32.totalorder %v25, 32
    %v27 = vsel %vm26, 1, 0
    %vm28 = vcmp.eq.s32.totalorder %v27, 1
    %v29 = vsel %vm28, %v23, -1e+30
    %vm30 = vcmask 261120
    %v31 = vsel %vm30, %v29, -inf
    %32 = vmax.xlane.f32.xlu0 %v31
    %v33 = vpop.xlane.xlu0 %32
    %v34 = vsub.f32 %v29, %v33
    %v35 = vld [vmem:[%s2] sm:$0xff]
    %v36 = vmul.f32 %v34, 1.442695
    %v37 = vpow.pop %v36
    %v38 = vsel %vm30, %v37, 0.0
    %39 = vadd.xlane.f32.xlu0 %v38
    %v40 = vpop.xlane.xlu0 %39
    %41 = vset.pattern.permute.xlu0 0
    %42 = vperm.xlu0 %41, %v35
    %v43 = vpop.permute.xlu0 %42
    %vm44 = vcmp.eq.s32.totalorder %v25, %v43
    %v45 = vsel %vm44, %v34, 0.0
    %v46 = vsel %vm30, %v45, 0.0
    %47 = vadd.xlane.f32.xlu0 %v46
    %v48 = vpop.xlane.xlu0 %47
    %v49 = vlog2.pop %v40
    %v50 = vmul.f32 %v49, 0.6931472
    %v51 = vsub.f32 %v50, %v48
    %v53 = vlaneseq
    %v54 = vshrl.u32 %v53, 7
    %v55 = vsub.s32 %v25, %v54
    %v56 = vrot.slane %v51, %v55
    %vm58 = vcmask 57344
    %59 = vst.msk [vmem:[#allocation2] sm:$0x1] %vm58, %v56
    // Predicated region
    $region14: #{_loss_call.1} parent=1 // pred_check
      _
    $region15: #{_loss_call.1} parent=1 // pred_check_branch
      %61 = sbr.rel (0) target = $region17
    $region16: #{_loss_call.1} parent=1 // pred_region
      %s63 = ssub.s32 16, 16
      %64 = vsyncadd [#allocation3], %s63
      %s66 = sshll.u32 [#allocation2], 4
      %s67 = int_to_ptr.vmem [resolvable:$true] %s66
      %69 = dma.vmem_to_hbm [thread:$0]  %s67, 16, %s3, [#allocation3]
    $region17: #{_loss_call.1} parent=1 // pred_fallthru
      _
    // Predicated region
    $region18: #{_loss_call.1} parent=1 // pred_check
      _
    $region19: #{_loss_call.1} parent=1 // pred_check_branch
      %71 = sbr.rel (0) target = $region21
    $region20: #{_loss_call.1} parent=1 // pred_region
      %72 = dma.done [#allocation3], 16
    $region21: #{_loss_call.1} parent=1 // pred_fallthru
      _
    %73 = vsyncpa [#allocation3], 1

</llo_original>
